<compile_context>
chip_gen: v7x
topology: tpu7x:2x2x1
jax: 0.10.0
libtpu: 0.0.40
codegen_flags: <defaults>
</compile_context>

<pallas_src>
import functools

import jax
import jax.numpy as jnp
from jax.experimental import pallas as pl
from jax.experimental.pallas import tpu as pltpu


def output_block_kernel(x_ref, w_ref, o_ref, *, n, in_c, out_c):
    """1x1 conv over the whole batch, gridless.

    x_ref: (N*IN_C, HW)  input, NCHW with (N,C) and (H,W) flattened (VMEM)
    w_ref: (OUT_C, IN_C) 1x1 conv weight slab (VMEM)
    o_ref: (N*OUT_C, HW) output, already NCHW-ordered, lane-dense (VMEM)
    """
    w = w_ref[...]
    # Static unroll over the tiny batch. Per sample: (OUT_C,IN_C) @ (IN_C,HW).
    # Output rows [i*OUT_C, (i+1)*OUT_C) are aligned full 8-sublane tiles ->
    # unmasked stores; input row slices are cheap static sub-tile views.
    for i in range(n):
        xs = x_ref[i * in_c:(i + 1) * in_c, :]
        o_ref[i * out_c:(i + 1) * out_c, :] = jnp.dot(
            w, xs, preferred_element_type=jnp.float32
        ).astype(o_ref.dtype)


def output_block_forward(x_nchw, w_oihw):
    """Forward pass equivalent to OutputBlock.forward (dim=2, bias=False)."""
    n, in_c, h, w_sp = x_nchw.shape
    out_c, w_in_c, kh, kw = w_oihw.shape
    assert (w_in_c, kh, kw) == (in_c, 1, 1), "expected 1x1 conv weight (O,I,1,1)"

    hw = h * w_sp
    x2 = x_nchw.reshape(n * in_c, hw)          # free, contiguous reshape
    w2 = w_oihw.reshape(out_c, in_c)           # (O, I, 1, 1) -> (O, I)

    itemsize = jnp.dtype(x2.dtype).itemsize
    out = pl.pallas_call(
        functools.partial(output_block_kernel, n=n, in_c=in_c, out_c=out_c),
        out_shape=jax.ShapeDtypeStruct((n * out_c, hw), x2.dtype),
        in_specs=[
            pl.BlockSpec(memory_space=pltpu.MemorySpace.VMEM),
            pl.BlockSpec(memory_space=pltpu.MemorySpace.VMEM),
        ],
        out_specs=pl.BlockSpec(memory_space=pltpu.MemorySpace.VMEM),
        cost_estimate=pl.CostEstimate(
            flops=2 * n * out_c * in_c * hw,
            bytes_accessed=(x2.size + w2.size + n * out_c * hw) * itemsize,
            transcendentals=0,
        ),
    )(x2, w2)

    return out.reshape(n, out_c, h, w_sp)      # free, contiguous reshape


if __name__ == "__main__":
    N, IN_C, OUT_C, H, W = 2, 4, 8, 16, 16

    key = jax.random.PRNGKey(0)
    kx, kw = jax.random.split(key, 2)

    # PyTorch Conv2d weight layout (OUT_C, IN_C, 1, 1); OutputBlock bias=False.
    x = jax.random.normal(kx, (N, IN_C, H, W), jnp.float32)
    w = jax.random.normal(kw, (OUT_C, IN_C, 1, 1), jnp.float32) * 0.1

    out = output_block_forward(x, w)
    jax.block_until_ready(out)
    assert out.shape == (N, OUT_C, H, W)

    # Correctness vs pure-JAX reference (1x1 conv == per-pixel channel matmul).
    ref = jnp.einsum('oc,nchw->nohw', w.reshape(OUT_C, IN_C), x)
    assert jnp.allclose(out, ref, atol=1e-5, rtol=1e-5)
    print("KERNEL_OK")
</pallas_src>

<mosaic_0001>
module attributes {stable_mosaic.version = 11 : i64} {
  func.func @output_block_kernel(%arg0: memref<8x256xf32, #tpu.memory_space<vmem>>, %arg1: memref<8x4xf32, #tpu.memory_space<vmem>>, %arg2: memref<16x256xf32, #tpu.memory_space<vmem>>) attributes {dimension_semantics = [], scalar_prefetch = 0 : i64, scratch_operands = 0 : i64, tpu.core_type = #tpu.core_type<tc>} {
    %c0 = arith.constant 0 : index
    %c0_0 = arith.constant 0 : index
    %0 = vector.load %arg1[%c0, %c0_0] : memref<8x4xf32, #tpu.memory_space<vmem>>, vector<8x4xf32>
    %c0_1 = arith.constant 0 : index
    %c0_2 = arith.constant 0 : index
    %1 = vector.load %arg0[%c0_1, %c0_2] : memref<8x256xf32, #tpu.memory_space<vmem>>, vector<4x256xf32>
    %cst = arith.constant dense<0.000000e+00> : vector<8x256xf32>
    %2 = tpu.matmul %0, %1, %cst {dimension_numbers = #tpu.dot_dimension_numbers<[1], [0], [0], [1], [0, 0, 1, 1], [], []>} : vector<8x4xf32>, vector<4x256xf32>, vector<8x256xf32> -> vector<8x256xf32>
    %c0_3 = arith.constant 0 : index
    %c0_4 = arith.constant 0 : index
    %3 = vector.load %arg2[%c0_3, %c0_4] : memref<16x256xf32, #tpu.memory_space<vmem>>, vector<8x256xf32>
    tpu.vector_store %arg2[%c0_3, %c0_4], %2 {strides = array<i32>} : memref<16x256xf32, #tpu.memory_space<vmem>>, vector<8x256xf32>,
    %c4 = arith.constant 4 : index
    %c0_5 = arith.constant 0 : index
    %4 = vector.load %arg0[%c4, %c0_5] : memref<8x256xf32, #tpu.memory_space<vmem>>, vector<4x256xf32>
    %cst_6 = arith.constant dense<0.000000e+00> : vector<8x256xf32>
    %5 = tpu.matmul %0, %4, %cst_6 {dimension_numbers = #tpu.dot_dimension_numbers<[1], [0], [0], [1], [0, 0, 1, 1], [], []>} : vector<8x4xf32>, vector<4x256xf32>, vector<8x256xf32> -> vector<8x256xf32>
    %c8 = arith.constant 8 : index
    %c0_7 = arith.constant 0 : index
    %6 = vector.load %arg2[%c8, %c0_7] : memref<16x256xf32, #tpu.memory_space<vmem>>, vector<8x256xf32>
    tpu.vector_store %arg2[%c8, %c0_7], %5 {strides = array<i32>} : memref<16x256xf32, #tpu.memory_space<vmem>>, vector<8x256xf32>,
    return
  }
}

</mosaic_0001>

<llo_original>
// kernel: tpu_custom_call.1
$region0: #{tpu_custom_call.1}
  #allocation0 [shape = 'u32[]', space=smem, size = 0x4, offset = 0x4, fixed_abs, tag = 'smem constant byte address 0x4 - core index']
  #allocation1 [shape = 'u32[144,128]{1,0:T(1,128)}', space=vmem, size = 0x12000, scoped, tag = 'internal scratch']
  %s0 = inlined_call_operand.hbm [shape: f32[8,256], index: 0, kind: input, shape index: {}]
  %s1 = inlined_call_operand.vmem [shape: f32[8,4], index: 1, kind: input, shape index: {}]
  %s2 = inlined_call_operand.hbm [shape: f32[16,256], index: 2, kind: output, shape index: {}]
  %s3 = sld [smem:[#allocation0]]
  $region22: #{tpu_custom_call.1} parent=0
    _
  %s5 = ssub.s32 1, %s3
  %s6 = scalar_select 0, %s5, %s3
  $region1: #{tpu_custom_call.1} parent=0
    #allocation2 [shape = 'u8[8192]{0}', space=vmem, size = 0x2000, scoped, tag = 'input window, operand 0, single buffered']
    #allocation3 [shape = 's32[1]{0}', space=sflag, size = 0x4, scoped, tag = 'scoped memory for tpu_custom_call.1']
    #allocation4 [shape = 's32[1]{0}', space=sflag, size = 0x4, scoped, tag = 'scoped memory for tpu_custom_call.1']
    #allocation5 [shape = 'u8[16384]{0}', space=vmem, size = 0x4000, scoped, tag = 'output window, operand 0, single buffered']
    %7 = vsyncpa [#allocation3], 0
    %8 = vsyncpa [#allocation4], 0
    // Predicated region
    $region2: #{tpu_custom_call.1} parent=1 // pred_check
      _
    $region3: #{tpu_custom_call.1} parent=1 // pred_check_branch
      %10 = sbr.rel (0) target = $region5
    $region4: #{tpu_custom_call.1} parent=1 // pred_region
      %s12 = ssub.s32 256, 256
      %13 = vsyncadd [#allocation3], %s12
      %s15 = sshll.u32 [#allocation2], 4
      %s16 = int_to_ptr.vmem [resolvable:$true] %s15
      %18 = dma.hbm_to_vmem [thread:$0]  %s0, 256, %s16, [#allocation3]
    $region5: #{tpu_custom_call.1} parent=1 // pred_fallthru
      _
    // Predicated region
    $region6: #{tpu_custom_call.1} parent=1 // pred_check
      _
    $region7: #{tpu_custom_call.1} parent=1 // pred_check_branch
      %20 = sbr.rel (0) target = $region9
    $region8: #{tpu_custom_call.1} parent=1 // pred_region
      _
    $region9: #{tpu_custom_call.1} parent=1 // pred_fallthru
      _
    // Predicated region
    $region10: #{tpu_custom_call.1} parent=1 // pred_check
      _
    $region11: #{tpu_custom_call.1} parent=1 // pred_check_branch
      %22 = sbr.rel (0) target = $region13
    $region12: #{tpu_custom_call.1} parent=1 // pred_region
      %23 = dma.done [#allocation3], 256
    $region13: #{tpu_custom_call.1} parent=1 // pred_fallthru
      _
    %v24 = vld [vmem:[%s1] sm:$0xff]
    %v25 = vld [vmem:[#allocation2] sm:$0xf]
    %v26 = vld [vmem:[#allocation2 + $0x8] sm:$0xf]
    %vm27 = vcmask 31744
    %v29 = vsel %vm27, %v24, 0
    %vm31 = vcmask 1043456
    %v33 = vsel %vm31, %v25, 0
    %v36 = vsel %vm31, %v26, 0
    %38 = vmatprep.subr.mxu0 %v36
    %39 = vmatpush1.msra.mxu0 %v33
    %40 = vmatprep.subr.mxu0 0.0
    %41 = vmatpush1.msra.mxu0 0.0
    %42 = vmatprep.subr.mxu0 0.0
    %43 = vmatpush1.msra.mxu0 0.0
    %44 = vmatprep.subr.mxu0 0.0
    %45 = vmatpush1.msra.mxu0 0.0
    %46 = vmatprep.subr.mxu0 0.0
    %47 = vmatpush1.msra.mxu0 0.0
    %48 = vmatprep.subr.mxu0 0.0
    %49 = vmatpush1.msra.mxu0 0.0
    %50 = vmatprep.subr.mxu0 0.0
    %51 = vmatpush1.msra.mxu0 0.0
    %52 = vmatprep.subr.mxu0 0.0
    %53 = vmatpush1.msra.mxu0 0.0
    %54 = vmatprep.subr.mxu0 0.0
    %55 = vmatpush1.msra.mxu0 0.0
    %56 = vmatprep.subr.mxu0 0.0
    %57 = vmatpush1.msra.mxu0 0.0
    %58 = vmatprep.subr.mxu0 0.0
    %59 = vmatpush1.msra.mxu0 0.0
    %60 = vmatprep.subr.mxu0 0.0
    %61 = vmatpush1.msra.mxu0 0.0
    %62 = vmatprep.subr.mxu0 0.0
    %63 = vmatpush1.msra.mxu0 0.0
    %64 = vmatprep.subr.mxu0 0.0
    %65 = vmatpush1.msra.mxu0 0.0
    %66 = vmatprep.subr.mxu0 0.0
    %67 = vmatpush1.msra.mxu0 0.0
    %68 = vmatprep.subr.mxu0 0.0
    %69 = vmatpush1.msra.mxu0 0.0
    %70 = vmatprep.subr.mxu0 0.0
    %71 = vmatpush1.msra.mxu0 0.0
    %72 = vmatprep.subr.mxu0 0.0
    %73 = vmatpush1.msra.mxu0 0.0
    %74 = vmatprep.subr.mxu0 0.0
    %75 = vmatpush1.msra.mxu0 0.0
    %76 = vmatprep.subr.mxu0 0.0
    %77 = vmatpush1.msra.mxu0 0.0
    %78 = vmatprep.subr.mxu0 0.0
    %79 = vmatpush1.msra.mxu0 0.0
    %80 = vmatprep.subr.mxu0 0.0
    %81 = vmatpush1.msra.mxu0 0.0
    %82 = vmatprep.subr.mxu0 0.0
    %83 = vmatpush1.msra.mxu0 0.0
    %84 = vmatprep.subr.mxu0 0.0
    %85 = vmatpush1.msra.mxu0 0.0
    %86 = vmatprep.subr.mxu0 0.0
    %87 = vmatpush1.msra.mxu0 0.0
    %88 = vmatprep.subr.mxu0 0.0
    %89 = vmatpush1.msra.mxu0 0.0
    %90 = vmatprep.subr.mxu0 0.0
    %91 = vmatpush1.msra.mxu0 0.0
    %92 = vmatprep.subr.mxu0 0.0
    %93 = vmatpush1.msra.mxu0 0.0
    %94 = vmatprep.subr.mxu0 0.0
    %95 = vmatpush1.msra.mxu0 0.0
    %96 = vmatprep.subr.mxu0 0.0
    %97 = vmatpush1.msra.mxu0 0.0
    %98 = vmatprep.subr.mxu0 0.0
    %99 = vmatpush1.msra.mxu0 0.0
    %100 = vmatprep.subr.mxu0 0.0
    %101 = vmatpush1.msra.mxu0 0.0
    %102 = vmatprep.mubr.f32.mxu0 0.0
    %103 = vmatmul.mubr.f32.gmra.mrb[0].mxu0 %v29
    %v104 = vpop.f32.mrb[0].mxu0
    %v105 = vadd.f32 0.0, %v104
    %v106 = vpop.f32.mrb[0].mxu0
    %v107 = vadd.f32 0.0, %v106
    %108 = vdwg.mxu0
    %109 = vst [vmem:[#allocation5] sm:$0xff] %v105
    %110 = vst [vmem:[#allocation5 + $0x8] sm:$0xff] %v107
    %v111 = vld [vmem:[#allocation2] sm:$0xf0]
    %v112 = vld [vmem:[#allocation2 + $0x8] sm:$0xf0]
    %v115 = vrot.slane %v111, 4
    %v116 = vrot.slane %v112, 4
    %v117 = vsel %vm31, %v115, 0
    %v119 = vsel %vm31, %v116, 0
    %121 = vmatprep.subr.mxu0 %v119
    %122 = vmatpush1.msra.mxu0 %v117
    %123 = vmatprep.subr.mxu0 0.0
    %124 = vmatpush1.msra.mxu0 0.0
    %125 = vmatprep.subr.mxu0 0.0
    %126 = vmatpush1.msra.mxu0 0.0
    %127 = vmatprep.subr.mxu0 0.0
    %128 = vmatpush1.msra.mxu0 0.0
    %129 = vmatprep.subr.mxu0 0.0
    %130 = vmatpush1.msra.mxu0 0.0
    %131 = vmatprep.subr.mxu0 0.0
    %132 = vmatpush1.msra.mxu0 0.0
    %133 = vmatprep.subr.mxu0 0.0
    %134 = vmatpush1.msra.mxu0 0.0
    %135 = vmatprep.subr.mxu0 0.0
    %136 = vmatpush1.msra.mxu0 0.0
    %137 = vmatprep.subr.mxu0 0.0
    %138 = vmatpush1.msra.mxu0 0.0
    %139 = vmatprep.subr.mxu0 0.0
    %140 = vmatpush1.msra.mxu0 0.0
    %141 = vmatprep.subr.mxu0 0.0
    %142 = vmatpush1.msra.mxu0 0.0
    %143 = vmatprep.subr.mxu0 0.0
    %144 = vmatpush1.msra.mxu0 0.0
    %145 = vmatprep.subr.mxu0 0.0
    %146 = vmatpush1.msra.mxu0 0.0
    %147 = vmatprep.subr.mxu0 0.0
    %148 = vmatpush1.msra.mxu0 0.0
    %149 = vmatprep.subr.mxu0 0.0
    %150 = vmatpush1.msra.mxu0 0.0
    %151 = vmatprep.subr.mxu0 0.0
    %152 = vmatpush1.msra.mxu0 0.0
    %153 = vmatprep.subr.mxu0 0.0
    %154 = vmatpush1.msra.mxu0 0.0
    %155 = vmatprep.subr.mxu0 0.0
    %156 = vmatpush1.msra.mxu0 0.0
    %157 = vmatprep.subr.mxu0 0.0
    %158 = vmatpush1.msra.mxu0 0.0
    %159 = vmatprep.subr.mxu0 0.0
    %160 = vmatpush1.msra.mxu0 0.0
    %161 = vmatprep.subr.mxu0 0.0
    %162 = vmatpush1.msra.mxu0 0.0
    %163 = vmatprep.subr.mxu0 0.0
    %164 = vmatpush1.msra.mxu0 0.0
    %165 = vmatprep.subr.mxu0 0.0
    %166 = vmatpush1.msra.mxu0 0.0
    %167 = vmatprep.subr.mxu0 0.0
    %168 = vmatpush1.msra.mxu0 0.0
    %169 = vmatprep.subr.mxu0 0.0
    %170 = vmatpush1.msra.mxu0 0.0
    %171 = vmatprep.subr.mxu0 0.0
    %172 = vmatpush1.msra.mxu0 0.0
    %173 = vmatprep.subr.mxu0 0.0
    %174 = vmatpush1.msra.mxu0 0.0
    %175 = vmatprep.subr.mxu0 0.0
    %176 = vmatpush1.msra.mxu0 0.0
    %177 = vmatprep.subr.mxu0 0.0
    %178 = vmatpush1.msra.mxu0 0.0
    %179 = vmatprep.subr.mxu0 0.0
    %180 = vmatpush1.msra.mxu0 0.0
    %181 = vmatprep.subr.mxu0 0.0
    %182 = vmatpush1.msra.mxu0 0.0
    %183 = vmatprep.subr.mxu0 0.0
    %184 = vmatpush1.msra.mxu0 0.0
    %185 = vmatprep.mubr.f32.mxu0 0.0
    %186 = vmatmul.mubr.f32.gmra.mrb[0].mxu0 %v29
    %v187 = vpop.f32.mrb[0].mxu0
    %v188 = vadd.f32 0.0, %v187
    %v189 = vpop.f32.mrb[0].mxu0
    %v190 = vadd.f32 0.0, %v189
    %191 = vdwg.mxu0
    %192 = vst [vmem:[#allocation5 + $0x10] sm:$0xff] %v188
    %193 = vst [vmem:[#allocation5 + $0x18] sm:$0xff] %v190
    // Predicated region
    $region14: #{tpu_custom_call.1} parent=1 // pred_check
      _
    $region15: #{tpu_custom_call.1} parent=1 // pred_check_branch
      %195 = sbr.rel (0) target = $region17
    $region16: #{tpu_custom_call.1} parent=1 // pred_region
      %s197 = ssub.s32 512, 512
      %198 = vsyncadd [#allocation4], %s197
      %s199 = sshll.u32 [#allocation5], 4
      %s200 = int_to_ptr.vmem [resolvable:$true] %s199
      %205 = dma.vmem_to_hbm [thread:$0]  %s200, 512, %s2, [#allocation4], 256, 256, 16
    $region17: #{tpu_custom_call.1} parent=1 // pred_fallthru
      _
    // Predicated region
    $region18: #{tpu_custom_call.1} parent=1 // pred_check
      _
    $region19: #{tpu_custom_call.1} parent=1 // pred_check_branch
      %207 = sbr.rel (0) target = $region21
    $region20: #{tpu_custom_call.1} parent=1 // pred_region
      %208 = dma.done [#allocation4], 512
    $region21: #{tpu_custom_call.1} parent=1 // pred_fallthru
      _
    %209 = vsyncpa [#allocation3], 1
    %210 = vsyncpa [#allocation4], 1

</llo_original>
